<compile_context>
chip_gen: v7x
topology: tpu7x:2x2x1
jax: 0.10.0
libtpu: 0.0.40
codegen_flags: <defaults>
</compile_context>

<pallas_src>
import jax
import jax.numpy as jnp
from jax.experimental import pallas as pl
from jax.experimental.pallas import tpu as pltpu

LANE = 128


def _round_up(n, m):
    return (n + m - 1) // m * m


def mlp_kernel(x_ref, w1_ref, b1_ref, w2_ref, b2_ref, w3_ref, b3_ref, o_ref):
    # Layer 1: Linear(F -> H) + ReLU. f32 MXU pass (K = num_features is tiny).
    h = jnp.dot(x_ref[...], w1_ref[...], preferred_element_type=jnp.float32)
    h = jnp.maximum(h + b1_ref[...], 0.0).astype(jnp.bfloat16)
    # Layer 2: Linear(H -> H) + ReLU. bf16 MXU pass, f32 accumulation.
    h = jnp.dot(h, w2_ref[...], preferred_element_type=jnp.float32)
    h = jnp.maximum(h + b2_ref[...], 0.0).astype(jnp.bfloat16)
    # Output layer, zero-padded to a full 128-lane slab -> unmasked store.
    out = jnp.dot(h, w3_ref[...], preferred_element_type=jnp.float32)
    o_ref[...] = (out + b3_ref[...]).astype(o_ref.dtype)


def prepare_params(params):
    """One-time glue, outside the hot path: transpose weights to [in, out],
    cast the 128-wide layers to bf16, make biases 2-D rows, and zero-pad the
    output layer to a lane-dense (multiple-of-128) width."""
    w1, b1 = params["w1"], params["b1"]
    w2, b2 = params["w2"], params["b2"]
    w3, b3 = params["w3"], params["b3"]
    out_dim = w3.shape[0]
    out_pad = _round_up(max(out_dim, LANE), LANE)

    w3t = jnp.zeros((w3.shape[1], out_pad), jnp.float32).at[:, :out_dim].set(w3.T)
    b3r = jnp.zeros((1, out_pad), jnp.float32).at[:, :out_dim].set(b3)

    return {
        "w1t": w1.T.astype(jnp.float32),          # [F, H]  (K=11 stays f32)
        "b1r": b1.reshape(1, -1).astype(jnp.float32),
        "w2t": w2.T.astype(jnp.bfloat16),         # [H, H]
        "b2r": b2.reshape(1, -1).astype(jnp.float32),
        "w3t": w3t.astype(jnp.bfloat16),          # [H, out_pad]
        "b3r": b3r,                               # [1, out_pad] f32
        "out_dim": out_dim,
    }


def airbnb_nn_forward(x, prep, *, tile_b=1024):
    """x: [B, num_features] f32. prep: output of prepare_params()."""
    B, F = x.shape
    H = prep["w2t"].shape[0]
    out_pad = prep["w3t"].shape[1]
    out_dim = prep["out_dim"]

    # Batch tile: large enough to amortize the ~0.35us/step overhead, small
    # enough that (x tile + out tile) x2 double-buffers + resident weights
    # stay well under the v7x scoped-VMEM limit.
    TB = min(tile_b, _round_up(B, 16))
    Bp = _round_up(B, TB)
    if Bp != B:
        x = jnp.pad(x, ((0, Bp - B), (0, 0)))

    resident = lambda i: (0, 0)  # weights/biases: same block every grid step

    out = pl.pallas_call(
        mlp_kernel,
        out_shape=jax.ShapeDtypeStruct((Bp, out_pad), jnp.float32),
        grid=(Bp // TB,),
        in_specs=[
            pl.BlockSpec((TB, F), lambda i: (i, 0)),   # streamed activations
            pl.BlockSpec((F, H), resident),
            pl.BlockSpec((1, H), resident),
            pl.BlockSpec((H, H), resident),
            pl.BlockSpec((1, H), resident),
            pl.BlockSpec((H, out_pad), resident),
            pl.BlockSpec((1, out_pad), resident),
        ],
        out_specs=pl.BlockSpec((TB, out_pad), lambda i: (i, 0)),
        compiler_params=pltpu.CompilerParams(
            dimension_semantics=("parallel",),
        ),
    )(x, prep["w1t"], prep["b1r"], prep["w2t"], prep["b2r"],
      prep["w3t"], prep["b3r"])

    return out[:B, :out_dim]


def init_params(key, num_features, hidden_layer_width=128, output_dim=1):
    """Deterministic init mimicking nn.Linear default (uniform +/- 1/sqrt(fan_in))."""
    ks = jax.random.split(key, 6)

    def lin(kw, kb, fan_in, fan_out):
        bound = 1.0 / jnp.sqrt(jnp.float32(fan_in))
        w = jax.random.uniform(kw, (fan_out, fan_in), jnp.float32, -bound, bound)
        b = jax.random.uniform(kb, (fan_out,), jnp.float32, -bound, bound)
        return w, b

    w1, b1 = lin(ks[0], ks[1], num_features, hidden_layer_width)
    w2, b2 = lin(ks[2], ks[3], hidden_layer_width, hidden_layer_width)
    w3, b3 = lin(ks[4], ks[5], hidden_layer_width, output_dim)
    return {"w1": w1, "b1": b1, "w2": w2, "b2": b2, "w3": w3, "b3": b3}


def reference_forward(x, params):
    """Pure-JAX reference mirroring the kernel's precision scheme
    (layer 1 f32; layers 2/3 bf16 operands with f32 accumulation)."""
    f32, bf = jnp.float32, jnp.bfloat16
    h = jnp.dot(x, params["w1"].T, preferred_element_type=f32) + params["b1"]
    h = jnp.maximum(h, 0.0).astype(bf)
    h = jnp.dot(h, params["w2"].T.astype(bf), preferred_element_type=f32) + params["b2"]
    h = jnp.maximum(h, 0.0).astype(bf)
    out = jnp.dot(h, params["w3"].T.astype(bf), preferred_element_type=f32) + params["b3"]
    return out


if __name__ == "__main__":
    num_features = 11
    hidden = 128

    key = jax.random.PRNGKey(0)
    k_x, k_p, k_x2 = jax.random.split(key, 3)
    params = init_params(k_p, num_features, hidden_layer_width=hidden, output_dim=1)
    prep = prepare_params(params)

    # Small-batch check (single tile).
    batch = 8
    x = jax.random.normal(k_x, (batch, num_features), jnp.float32)
    out = jax.block_until_ready(airbnb_nn_forward(x, prep))
    ref = reference_forward(x, params)
    assert out.shape == (batch, 1), out.shape
    assert jnp.allclose(out, ref, atol=2e-2, rtol=2e-2), "mismatch vs reference (small batch)"

    # Multi-tile grid check with a non-divisible batch (exercises pad + slice).
    batch2 = 1000
    x2 = jax.random.normal(k_x2, (batch2, num_features), jnp.float32)
    out2 = jax.block_until_ready(airbnb_nn_forward(x2, prep, tile_b=256))
    ref2 = reference_forward(x2, params)
    assert out2.shape == (batch2, 1), out2.shape
    assert jnp.allclose(out2, ref2, atol=2e-2, rtol=2e-2), "mismatch vs reference (gridded batch)"

    print("KERNEL_OK")
</pallas_src>

<mosaic_0001>
module attributes {stable_mosaic.version = 11 : i64} {
  func.func @mlp_kernel(%arg0: i32, %arg1: memref<16x11xf32, #tpu.memory_space<vmem>>, %arg2: memref<11x128xf32, #tpu.memory_space<vmem>>, %arg3: memref<1x128xf32, #tpu.memory_space<vmem>>, %arg4: memref<128x128xbf16, #tpu.memory_space<vmem>>, %arg5: memref<1x128xf32, #tpu.memory_space<vmem>>, %arg6: memref<128x128xbf16, #tpu.memory_space<vmem>>, %arg7: memref<1x128xf32, #tpu.memory_space<vmem>>, %arg8: memref<16x128xf32, #tpu.memory_space<vmem>>) attributes {dimension_semantics = [#tpu.dimension_semantics<parallel>], iteration_bounds = array<i64: 1>, scalar_prefetch = 0 : i64, scratch_operands = 0 : i64, tpu.core_type = #tpu.core_type<tc>, window_params = [{transform_indices = @transform_0, window_bounds = array<i64: 16, 11>}, {pipeline_mode = #tpu.pipeline_mode<synchronous>, transform_indices = @transform_1, window_bounds = array<i64: 11, 128>}, {pipeline_mode = #tpu.pipeline_mode<synchronous>, transform_indices = @transform_2, window_bounds = array<i64: 1, 128>}, {pipeline_mode = #tpu.pipeline_mode<synchronous>, transform_indices = @transform_3, window_bounds = array<i64: 128, 128>}, {pipeline_mode = #tpu.pipeline_mode<synchronous>, transform_indices = @transform_4, window_bounds = array<i64: 1, 128>}, {pipeline_mode = #tpu.pipeline_mode<synchronous>, transform_indices = @transform_5, window_bounds = array<i64: 128, 128>}, {pipeline_mode = #tpu.pipeline_mode<synchronous>, transform_indices = @transform_6, window_bounds = array<i64: 1, 128>}, {transform_indices = @transform_7, window_bounds = array<i64: 16, 128>}]} {
    %c0 = arith.constant 0 : index
    %c0_0 = arith.constant 0 : index
    %0 = vector.load %arg1[%c0, %c0_0] : memref<16x11xf32, #tpu.memory_space<vmem>>, vector<16x11xf32>
    %c0_1 = arith.constant 0 : index
    %c0_2 = arith.constant 0 : index
    %1 = vector.load %arg2[%c0_1, %c0_2] : memref<11x128xf32, #tpu.memory_space<vmem>>, vector<11x128xf32>
    %cst = arith.constant dense<0.000000e+00> : vector<16x128xf32>
    %2 = tpu.matmul %0, %1, %cst {dimension_numbers = #tpu.dot_dimension_numbers<[1], [0], [0], [1], [0, 0, 1, 1], [], []>} : vector<16x11xf32>, vector<11x128xf32>, vector<16x128xf32> -> vector<16x128xf32>
    %c0_3 = arith.constant 0 : index
    %c0_4 = arith.constant 0 : index
    %3 = vector.load %arg3[%c0_3, %c0_4] : memref<1x128xf32, #tpu.memory_space<vmem>>, vector<1x128xf32>
    %4 = vector.broadcast %3 : vector<1x128xf32> to vector<16x128xf32>
    %5 = arith.addf %2, %4 : vector<16x128xf32>
    %cst_5 = arith.constant 0.000000e+00 : f32
    %6 = vector.broadcast %cst_5 : f32 to vector<16x128xf32>
    %7 = arith.maximumf %5, %6 : vector<16x128xf32>
    %8 = arith.truncf %7 : vector<16x128xf32> to vector<16x128xbf16>
    %c0_6 = arith.constant 0 : index
    %c0_7 = arith.constant 0 : index
    %9 = vector.load %arg4[%c0_6, %c0_7] : memref<128x128xbf16, #tpu.memory_space<vmem>>, vector<128x128xbf16>
    %cst_8 = arith.constant dense<0.000000e+00> : vector<16x128xf32>
    %10 = tpu.matmul %8, %9, %cst_8 {dimension_numbers = #tpu.dot_dimension_numbers<[1], [0], [0], [1], [0, 0, 1, 1], [], []>} : vector<16x128xbf16>, vector<128x128xbf16>, vector<16x128xf32> -> vector<16x128xf32>
    %c0_9 = arith.constant 0 : index
    %c0_10 = arith.constant 0 : index
    %11 = vector.load %arg5[%c0_9, %c0_10] : memref<1x128xf32, #tpu.memory_space<vmem>>, vector<1x128xf32>
    %12 = vector.broadcast %11 : vector<1x128xf32> to vector<16x128xf32>
    %13 = arith.addf %10, %12 : vector<16x128xf32>
    %cst_11 = arith.constant 0.000000e+00 : f32
    %14 = vector.broadcast %cst_11 : f32 to vector<16x128xf32>
    %15 = arith.maximumf %13, %14 : vector<16x128xf32>
    %16 = arith.truncf %15 : vector<16x128xf32> to vector<16x128xbf16>
    %c0_12 = arith.constant 0 : index
    %c0_13 = arith.constant 0 : index
    %17 = vector.load %arg6[%c0_12, %c0_13] : memref<128x128xbf16, #tpu.memory_space<vmem>>, vector<128x128xbf16>
    %cst_14 = arith.constant dense<0.000000e+00> : vector<16x128xf32>
    %18 = tpu.matmul %16, %17, %cst_14 {dimension_numbers = #tpu.dot_dimension_numbers<[1], [0], [0], [1], [0, 0, 1, 1], [], []>} : vector<16x128xbf16>, vector<128x128xbf16>, vector<16x128xf32> -> vector<16x128xf32>
    %c0_15 = arith.constant 0 : index
    %c0_16 = arith.constant 0 : index
    %19 = vector.load %arg7[%c0_15, %c0_16] : memref<1x128xf32, #tpu.memory_space<vmem>>, vector<1x128xf32>
    %20 = vector.broadcast %19 : vector<1x128xf32> to vector<16x128xf32>
    %21 = arith.addf %18, %20 : vector<16x128xf32>
    %c0_17 = arith.constant 0 : index
    %c0_18 = arith.constant 0 : index
    %22 = vector.load %arg8[%c0_17, %c0_18] : memref<16x128xf32, #tpu.memory_space<vmem>>, vector<16x128xf32>
    tpu.vector_store %arg8[%c0_17, %c0_18], %21 {strides = array<i32>} : memref<16x128xf32, #tpu.memory_space<vmem>>, vector<16x128xf32>,
    return
  }
  func.func @transform_0(%arg0: i32) -> (i32, i32) {
    %c0_i32 = arith.constant 0 : i32
    %c0_i32_0 = arith.constant 0 : i32
    return %arg0, %c0_i32 : i32, i32
  }
  func.func @transform_1(%arg0: i32) -> (i32, i32) {
    %c0_i32 = arith.constant 0 : i32
    %c0_i32_0 = arith.constant 0 : i32
    %c0_i32_1 = arith.constant 0 : i32
    return %c0_i32, %c0_i32_0 : i32, i32
  }
  func.func @transform_2(%arg0: i32) -> (i32, i32) {
    %c0_i32 = arith.constant 0 : i32
    %c0_i32_0 = arith.constant 0 : i32
    %c0_i32_1 = arith.constant 0 : i32
    return %c0_i32, %c0_i32_0 : i32, i32
  }
  func.func @transform_3(%arg0: i32) -> (i32, i32) {
    %c0_i32 = arith.constant 0 : i32
    %c0_i32_0 = arith.constant 0 : i32
    %c0_i32_1 = arith.constant 0 : i32
    return %c0_i32, %c0_i32_0 : i32, i32
  }
  func.func @transform_4(%arg0: i32) -> (i32, i32) {
    %c0_i32 = arith.constant 0 : i32
    %c0_i32_0 = arith.constant 0 : i32
    %c0_i32_1 = arith.constant 0 : i32
    return %c0_i32, %c0_i32_0 : i32, i32
  }
  func.func @transform_5(%arg0: i32) -> (i32, i32) {
    %c0_i32 = arith.constant 0 : i32
    %c0_i32_0 = arith.constant 0 : i32
    %c0_i32_1 = arith.constant 0 : i32
    return %c0_i32, %c0_i32_0 : i32, i32
  }
  func.func @transform_6(%arg0: i32) -> (i32, i32) {
    %c0_i32 = arith.constant 0 : i32
    %c0_i32_0 = arith.constant 0 : i32
    %c0_i32_1 = arith.constant 0 : i32
    return %c0_i32, %c0_i32_0 : i32, i32
  }
  func.func @transform_7(%arg0: i32) -> (i32, i32) {
    %c0_i32 = arith.constant 0 : i32
    %c0_i32_0 = arith.constant 0 : i32
    return %arg0, %c0_i32 : i32, i32
  }
}

</mosaic_0001>

<llo_original>
// kernel: tpu_custom_call.1
$region0: #{tpu_custom_call.1}
  #allocation0 [shape = 'u32[]', space=smem, size = 0x4, offset = 0x4, fixed_abs, tag = 'smem constant byte address 0x4 - core index']
  #allocation1 [shape = 'u32[144,128]{1,0:T(1,128)}', space=vmem, size = 0x12000, scoped, tag = 'internal scratch']
  %s0 = inlined_call_operand.hbm [shape: f32[16,11], index: 0, kind: input, shape index: {}]
  %s1 = inlined_call_operand.hbm [shape: f32[11,128], index: 1, kind: input, shape index: {}]
  %s2 = inlined_call_operand.vmem [shape: f32[1,128], index: 2, kind: input, shape index: {}]
  %s3 = inlined_call_operand.hbm [shape: bf16[128,128], index: 3, kind: input, shape index: {}]
  %s4 = inlined_call_operand.vmem [shape: f32[1,128], index: 4, kind: input, shape index: {}]
  %s5 = inlined_call_operand.hbm [shape: bf16[128,128], index: 5, kind: input, shape index: {}]
  %s6 = inlined_call_operand.vmem [shape: f32[1,128], index: 6, kind: input, shape index: {}]
  %s7 = inlined_call_operand.hbm [shape: f32[16,128], index: 7, kind: output, shape index: {}]
  %s8 = sld [smem:[#allocation0]]
  $region54: #{tpu_custom_call.1} parent=0
    _
  %s10 = ssub.s32 1, %s8
  %s11 = scalar_select 0, %s10, %s8
  $region1: #{tpu_custom_call.1} parent=0
    #allocation2 [shape = 'u8[8192]{0}', space=vmem, size = 0x2000, scoped, tag = 'input window, operand 0, single buffered']
    #allocation3 [shape = 's32[1]{0}', space=sflag, size = 0x4, scoped, tag = 'scoped memory for tpu_custom_call.1']
    #allocation4 [shape = 's32[1]{0}', space=sflag, size = 0x4, scoped, tag = 'scoped memory for tpu_custom_call.1']
    #allocation5 [shape = 'u8[8192]{0}', space=vmem, size = 0x2000, scoped, tag = 'input window, operand 1, single buffered']
    #allocation6 [shape = 's32[1]{0}', space=sflag, size = 0x4, scoped, tag = 'scoped memory for tpu_custom_call.1']
    #allocation7 [shape = 'u8[32768]{0}', space=vmem, size = 0x8000, scoped, tag = 'input window, operand 3, single buffered']
    #allocation8 [shape = 'u8[32768]{0}', space=vmem, size = 0x8000, scoped, tag = 'input window, operand 5, single buffered']
    #allocation9 [shape = 's32[1]{0}', space=sflag, size = 0x4, scoped, tag = 'scoped memory for tpu_custom_call.1']
    #allocation10 [shape = 'u8[8192]{0}', space=vmem, size = 0x2000, scoped, tag = 'output window, operand 0, single buffered']
    %12 = vsyncpa [#allocation3], 0
    %13 = vsyncpa [#allocation6], 0
    %14 = vsyncpa [#allocation9], 0
    %15 = vsyncpa [#allocation4], 0
    // Predicated region
    $region2: #{tpu_custom_call.1} parent=1 // pred_check
      _
    $region3: #{tpu_custom_call.1} parent=1 // pred_check_branch
      %17 = sbr.rel (0) target = $region5
    $region4: #{tpu_custom_call.1} parent=1 // pred_region
      %s19 = ssub.s32 256, 256
      %20 = vsyncadd [#allocation3], %s19
      %s21 = sshll.u32 [#allocation2], 4
      %s22 = int_to_ptr.vmem [resolvable:$true] %s21
      %27 = dma.hbm_to_vmem [thread:$0]  %s0, 256, %s22, [#allocation3], 128, 128, 8
    $region5: #{tpu_custom_call.1} parent=1 // pred_fallthru
      _
    // Predicated region
    $region6: #{tpu_custom_call.1} parent=1 // pred_check
      _
    $region7: #{tpu_custom_call.1} parent=1 // pred_check_branch
      %29 = sbr.rel (0) target = $region9
    $region8: #{tpu_custom_call.1} parent=1 // pred_region
      %s31 = ssub.s32 256, 256
      %32 = vsyncadd [#allocation6], %s31
      %s33 = sshll.u32 [#allocation5], 4
      %s34 = int_to_ptr.vmem [resolvable:$true] %s33
      %39 = dma.hbm_to_vmem [thread:$0]  %s1, 256, %s34, [#allocation6], 128, 128, 8
    $region9: #{tpu_custom_call.1} parent=1 // pred_fallthru
      _
    // Predicated region
    $region10: #{tpu_custom_call.1} parent=1 // pred_check
      _
    $region11: #{tpu_custom_call.1} parent=1 // pred_check_branch
      %41 = sbr.rel (0) target = $region13
    $region12: #{tpu_custom_call.1} parent=1 // pred_region
      _
    $region13: #{tpu_custom_call.1} parent=1 // pred_fallthru
      _
    // Predicated region
    $region14: #{tpu_custom_call.1} parent=1 // pred_check
      _
    $region15: #{tpu_custom_call.1} parent=1 // pred_check_branch
      %43 = sbr.rel (0) target = $region17
    $region16: #{tpu_custom_call.1} parent=1 // pred_region
      %s45 = ssub.s32 1024, 1024
      %46 = vsyncadd [#allocation6], %s45
      %s47 = sshll.u32 [#allocation7], 4
      %s48 = int_to_ptr.vmem [resolvable:$true] %s47
      %53 = dma.hbm_to_vmem [thread:$0]  %s3, 1024, %s48, [#allocation6], 64, 64, 4
    $region17: #{tpu_custom_call.1} parent=1 // pred_fallthru
      _
    // Predicated region
    $region18: #{tpu_custom_call.1} parent=1 // pred_check
      _
    $region19: #{tpu_custom_call.1} parent=1 // pred_check_branch
      %55 = sbr.rel (0) target = $region21
    $region20: #{tpu_custom_call.1} parent=1 // pred_region
      _
    $region21: #{tpu_custom_call.1} parent=1 // pred_fallthru
      _
    // Predicated region
    $region22: #{tpu_custom_call.1} parent=1 // pred_check
      _
    $region23: #{tpu_custom_call.1} parent=1 // pred_check_branch
      %57 = sbr.rel (0) target = $region25
    $region24: #{tpu_custom_call.1} parent=1 // pred_region
      %s59 = ssub.s32 1024, 1024
      %60 = vsyncadd [#allocation9], %s59
      %s61 = sshll.u32 [#allocation8], 4
      %s62 = int_to_ptr.vmem [resolvable:$true] %s61
      %67 = dma.hbm_to_vmem [thread:$0]  %s5, 1024, %s62, [#allocation9], 64, 64, 4
    $region25: #{tpu_custom_call.1} parent=1 // pred_fallthru
      _
    // Predicated region
    $region26: #{tpu_custom_call.1} parent=1 // pred_check
      _
    $region27: #{tpu_custom_call.1} parent=1 // pred_check_branch
      %69 = sbr.rel (0) target = $region29
    $region28: #{tpu_custom_call.1} parent=1 // pred_region
      _
    $region29: #{tpu_custom_call.1} parent=1 // pred_fallthru
      _
    // Predicated region
    $region30: #{tpu_custom_call.1} parent=1 // pred_check
      _
    $region31: #{tpu_custom_call.1} parent=1 // pred_check_branch
      %71 = sbr.rel (0) target = $region33
    $region32: #{tpu_custom_call.1} parent=1 // pred_region
      %72 = dma.done [#allocation3], 256
    $region33: #{tpu_custom_call.1} parent=1 // pred_fallthru
      _
    // Predicated region
    $region34: #{tpu_custom_call.1} parent=1 // pred_check
      _
    $region35: #{tpu_custom_call.1} parent=1 // pred_check_branch
      %74 = sbr.rel (0) target = $region37
    $region36: #{tpu_custom_call.1} parent=1 // pred_region
      %75 = dma.done [#allocation6], 256
    $region37: #{tpu_custom_call.1} parent=1 // pred_fallthru
      _
    // Predicated region
    $region38: #{tpu_custom_call.1} parent=1 // pred_check
      _
    $region39: #{tpu_custom_call.1} parent=1 // pred_check_branch
      %77 = sbr.rel (0) target = $region41
    $region40: #{tpu_custom_call.1} parent=1 // pred_region
      %78 = dma.done [#allocation6], 1024
    $region41: #{tpu_custom_call.1} parent=1 // pred_fallthru
      _
    // Predicated region
    $region42: #{tpu_custom_call.1} parent=1 // pred_check
      _
    $region43: #{tpu_custom_call.1} parent=1 // pred_check_branch
      %80 = sbr.rel (0) target = $region45
    $region44: #{tpu_custom_call.1} parent=1 // pred_region
      %81 = dma.done [#allocation9], 1024
    $region45: #{tpu_custom_call.1} parent=1 // pred_fallthru
      _
    %v83 = vld [vmem:[#allocation2] sm:$0xff]
    %v84 = vld [vmem:[#allocation2 + $0x8] sm:$0xff]
    %v85 = vld [vmem:[#allocation5] sm:$0xff]
    %v86 = vld [vmem:[#allocation5 + $0x8] sm:$0x7]
    %v87 = vld [vmem:[%s2] sm:$0x1]
    %v89 = vlaneseq
    %v90 = vshrl.u32 %v89, 7
    %v91 = vsub.s32 0, %v90
    %v92 = vrot.slane %v87, %v91
    %vm94 = vcmask 89088
    %v96 = vsel %vm94, %v83, 0
    %v99 = vsel %vm94, %v84, 0
    %vm101 = vcmask 1042432
    %v103 = vsel %vm101, %v86, 0
    %105 = vmatprep.subr.mxu0 0.0
    %106 = vmatpush1.msra.mxu0 %v85
    %107 = vmatprep.subr.mxu0 0.0
    %108 = vmatpush1.msra.mxu0 %v103
    %109 = vmatprep.subr.mxu0 0.0
    %110 = vmatpush1.msra.mxu0 0.0
    %111 = vmatprep.subr.mxu0 0.0
    %112 = vmatpush1.msra.mxu0 0.0
    %113 = vmatprep.subr.mxu0 0.0
    %114 = vmatpush1.msra.mxu0 0.0
    %115 = vmatprep.subr.mxu0 0.0
    %116 = vmatpush1.msra.mxu0 0.0
    %117 = vmatprep.subr.mxu0 0.0
    %118 = vmatpush1.msra.mxu0 0.0
    %119 = vmatprep.subr.mxu0 0.0
    %120 = vmatpush1.msra.mxu0 0.0
    %121 = vmatprep.subr.mxu0 0.0
    %122 = vmatpush1.msra.mxu0 0.0
    %123 = vmatprep.subr.mxu0 0.0
    %124 = vmatpush1.msra.mxu0 0.0
    %125 = vmatprep.subr.mxu0 0.0
    %126 = vmatpush1.msra.mxu0 0.0
    %127 = vmatprep.subr.mxu0 0.0
    %128 = vmatpush1.msra.mxu0 0.0
    %129 = vmatprep.subr.mxu0 0.0
    %130 = vmatpush1.msra.mxu0 0.0
    %131 = vmatprep.subr.mxu0 0.0
    %132 = vmatpush1.msra.mxu0 0.0
    %133 = vmatprep.subr.mxu0 0.0
    %134 = vmatpush1.msra.mxu0 0.0
    %135 = vmatprep.subr.mxu0 0.0
    %136 = vmatpush1.msra.mxu0 0.0
    %137 = vmatprep.subr.mxu0 0.0
    %138 = vmatpush1.msra.mxu0 0.0
    %139 = vmatprep.subr.mxu0 0.0
    %140 = vmatpush1.msra.mxu0 0.0
    %141 = vmatprep.subr.mxu0 0.0
    %142 = vmatpush1.msra.mxu0 0.0
    %143 = vmatprep.subr.mxu0 0.0
    %144 = vmatpush1.msra.mxu0 0.0
    %145 = vmatprep.subr.mxu0 0.0
    %146 = vmatpush1.msra.mxu0 0.0
    %147 = vmatprep.subr.mxu0 0.0
    %148 = vmatpush1.msra.mxu0 0.0
    %149 = vmatprep.subr.mxu0 0.0
    %150 = vmatpush1.msra.mxu0 0.0
    %151 = vmatprep.subr.mxu0 0.0
    %152 = vmatpush1.msra.mxu0 0.0
    %153 = vmatprep.subr.mxu0 0.0
    %154 = vmatpush1.msra.mxu0 0.0
    %155 = vmatprep.subr.mxu0 0.0
    %156 = vmatpush1.msra.mxu0 0.0
    %157 = vmatprep.subr.mxu0 0.0
    %158 = vmatpush1.msra.mxu0 0.0
    %159 = vmatprep.subr.mxu0 0.0
    %160 = vmatpush1.msra.mxu0 0.0
    %161 = vmatprep.subr.mxu0 0.0
    %162 = vmatpush1.msra.mxu0 0.0
    %163 = vmatprep.subr.mxu0 0.0
    %164 = vmatpush1.msra.mxu0 0.0
    %165 = vmatprep.subr.mxu0 0.0
    %166 = vmatpush1.msra.mxu0 0.0
    %167 = vmatprep.subr.mxu0 0.0
    %168 = vmatpush1.msra.mxu0 0.0
    %169 = vmatprep.mubr.f32.mxu0 0.0
    %170 = vmatmul.mubr.f32.gmra.mrb[0].mxu0 %v96
    %v171 = vpop.f32.mrb[0].mxu0
    %v172 = vadd.f32 %v92, %v171
    %v173 = vpop.f32.mrb[0].mxu0
    %174 = vmatprep.mubr.f32.mxu0 0.0
    %175 = vmatmul.mubr.f32.gmra.mrb[0].mxu0 %v99
    %v176 = vpop.f32.mrb[0].mxu0
    %v177 = vadd.f32 %v92, %v176
    %v178 = vpop.f32.mrb[0].mxu0
    %179 = vdwg.mxu0
    %v180 = vmax.f32 %v172, 0.0
    %v181 = vmax.f32 %v177, 0.0
    %v182 = vpack.c.bf16 %v181, %v180
    %v183 = vld [vmem:[#allocation7] sm:$0xf]
    %v184 = vld [vmem:[#allocation7 + $0x4] sm:$0xf]
    %v185 = vld [vmem:[#allocation7 + $0x8] sm:$0xf]
    %v186 = vld [vmem:[#allocation7 + $0xc] sm:$0xf]
    %v187 = vld [vmem:[#allocation7 + $0x10] sm:$0xf]
    %v188 = vld [vmem:[#allocation7 + $0x14] sm:$0xf]
    %v189 = vld [vmem:[#allocation7 + $0x18] sm:$0xf]
    %v190 = vld [vmem:[#allocation7 + $0x1c] sm:$0xf]
    %v191 = vld [vmem:[#allocation7 + $0x20] sm:$0xf]
    %v192 = vld [vmem:[#allocation7 + $0x24] sm:$0xf]
    %v193 = vld [vmem:[#allocation7 + $0x28] sm:$0xf]
    %v194 = vld [vmem:[#allocation7 + $0x2c] sm:$0xf]
    %v195 = vld [vmem:[#allocation7 + $0x30] sm:$0xf]
    %v196 = vld [vmem:[#allocation7 + $0x34] sm:$0xf]
    %v197 = vld [vmem:[#allocation7 + $0x38] sm:$0xf]
    %v198 = vld [vmem:[#allocation7 + $0x3c] sm:$0xf]
    %v199 = vld [vmem:[%s4] sm:$0x1]
    %v201 = vlaneseq
    %v202 = vshrl.u32 %v201, 7
    %v203 = vsub.s32 0, %v202
    %v204 = vrot.slane %v199, %v203
    %v222 = vunpack.c.l.b16 %v183
    %v223 = vunpack.c.l.b16 %v184
    %v224 = vunpack.c.l.b16 %v185
    %v225 = vunpack.c.l.b16 %v186
    %v226 = vunpack.c.l.b16 %v187
    %v227 = vunpack.c.l.b16 %v188
    %v228 = vunpack.c.l.b16 %v189
    %v229 = vunpack.c.l.b16 %v190
    %v230 = vunpack.c.l.b16 %v191
    %v231 = vunpack.c.l.b16 %v192
    %v232 = vunpack.c.l.b16 %v193
    %v233 = vunpack.c.l.b16 %v194
    %v234 = vunpack.c.l.b16 %v195
    %v235 = vunpack.c.l.b16 %v196
    %v236 = vunpack.c.l.b16 %v197
    %v237 = vunpack.c.l.b16 %v198
    %v238 = vpack.c.b16 %v223, %v222
    %v239 = vpack.c.b16 %v225, %v224
    %v240 = vpack.c.b16 %v227, %v226
    %v241 = vpack.c.b16 %v229, %v228
    %v242 = vpack.c.b16 %v231, %v230
    %v243 = vpack.c.b16 %v233, %v232
    %v244 = vpack.c.b16 %v235, %v234
    %v245 = vpack.c.b16 %v237, %v236
    %254 = vmatprep.subr.bf16.mxu0 0
    %255 = vmatpush1.bf16.msra.mxu0 %v238
    %256 = vmatprep.subr.bf16.mxu0 0
    %257 = vmatpush1.bf16.msra.mxu0 %v239
    %258 = vmatprep.subr.bf16.mxu0 0
    %259 = vmatpush1.bf16.msra.mxu0 %v240
    %260 = vmatprep.subr.bf16.mxu0 0
    %261 = vmatpush1.bf16.msra.mxu0 %v241
    %262 = vmatprep.subr.bf16.mxu0 0
    %263 = vmatpush1.bf16.msra.mxu0 %v242
    %264 = vmatprep.subr.bf16.mxu0 0
    %265 = vmatpush1.bf16.msra.mxu0 %v243
    %266 = vmatprep.subr.bf16.mxu0 0
    %267 = vmatpush1.bf16.msra.mxu0 %v244
    %268 = vmatprep.subr.bf16.mxu0 0
    %269 = vmatpush1.bf16.msra.mxu0 %v245
    %270 = vmatprep.subr.bf16.mxu0 0
    %271 = vmatpush1.bf16.msra.mxu0 0
    %272 = vmatprep.subr.bf16.mxu0 0
    %273 = vmatpush1.bf16.msra.mxu0 0
    %274 = vmatprep.subr.bf16.mxu0 0
    %275 = vmatpush1.bf16.msra.mxu0 0
    %276 = vmatprep.subr.bf16.mxu0 0
    %277 = vmatpush1.bf16.msra.mxu0 0
    %278 = vmatprep.subr.bf16.mxu0 0
    %279 = vmatpush1.bf16.msra.mxu0 0
    %280 = vmatprep.subr.bf16.mxu0 0
    %281 = vmatpush1.bf16.msra.mxu0 0
    %282 = vmatprep.subr.bf16.mxu0 0
    %283 = vmatpush1.bf16.msra.mxu0 0
    %284 = vmatprep.subr.bf16.mxu0 0
    %285 = vmatpush1.bf16.msra.mxu0 0
    %286 = vmatprep.mubr.bf16.mxu0 0
    %287 = vmatmul.mubr.bf16.gmra.mrb[0].mxu0 %v182
    %v288 = vpop.f32.mrb[0].mxu0
    %v289 = vadd.f32 %v204, %v288
    %v290 = vpop.f32.mrb[0].mxu0
    %v291 = vpop.f32.mrb[0].mxu0
    %v292 = vadd.f32 %v204, %v291
    %v293 = vpop.f32.mrb[0].mxu0
    %294 = vdwg.mxu0
    %v295 = vmax.f32 %v289, 0.0
    %v296 = vmax.f32 %v292, 0.0
    %v297 = vpack.c.bf16 %v296, %v295
    %v298 = vld [vmem:[#allocation8] sm:$0xf]
    %v299 = vld [vmem:[#allocation8 + $0x4] sm:$0xf]
    %v300 = vld [vmem:[#allocation8 + $0x8] sm:$0xf]
    %v301 = vld [vmem:[#allocation8 + $0xc] sm:$0xf]
    %v302 = vld [vmem:[#allocation8 + $0x10] sm:$0xf]
    %v303 = vld [vmem:[#allocation8 + $0x14] sm:$0xf]
    %v304 = vld [vmem:[#allocation8 + $0x18] sm:$0xf]
    %v305 = vld [vmem:[#allocation8 + $0x1c] sm:$0xf]
    %v306 = vld [vmem:[#allocation8 + $0x20] sm:$0xf]
    %v307 = vld [vmem:[#allocation8 + $0x24] sm:$0xf]
    %v308 = vld [vmem:[#allocation8 + $0x28] sm:$0xf]
    %v309 = vld [vmem:[#allocation8 + $0x2c] sm:$0xf]
    %v310 = vld [vmem:[#allocation8 + $0x30] sm:$0xf]
    %v311 = vld [vmem:[#allocation8 + $0x34] sm:$0xf]
    %v312 = vld [vmem:[#allocation8 + $0x38] sm:$0xf]
    %v313 = vld [vmem:[#allocation8 + $0x3c] sm:$0xf]
    %v314 = vld [vmem:[%s6] sm:$0x1]
    %v316 = vlaneseq
    %v317 = vshrl.u32 %v316, 7
    %v318 = vsub.s32 0, %v317
    %v319 = vrot.slane %v314, %v318
    %v337 = vunpack.c.l.b16 %v298
    %v338 = vunpack.c.l.b16 %v299
    %v339 = vunpack.c.l.b16 %v300
    %v340 = vunpack.c.l.b16 %v301
    %v341 = vunpack.c.l.b16 %v302
    %v342 = vunpack.c.l.b16 %v303
    %v343 = vunpack.c.l.b16 %v304
    %v344 = vunpack.c.l.b16 %v305
    %v345 = vunpack.c.l.b16 %v306
    %v346 = vunpack.c.l.b16 %v307
    %v347 = vunpack.c.l.b16 %v308
    %v348 = vunpack.c.l.b16 %v309
    %v349 = vunpack.c.l.b16 %v310
    %v350 = vunpack.c.l.b16 %v311
    %v351 = vunpack.c.l.b16 %v312
    %v352 = vunpack.c.l.b16 %v313
    %v353 = vpack.c.b16 %v338, %v337
    %v354 = vpack.c.b16 %v340, %v339
    %v355 = vpack.c.b16 %v342, %v341
    %v356 = vpack.c.b16 %v344, %v343
    %v357 = vpack.c.b16 %v346, %v345
    %v358 = vpack.c.b16 %v348, %v347
    %v359 = vpack.c.b16 %v350, %v349
    %v360 = vpack.c.b16 %v352, %v351
    %369 = vmatprep.subr.bf16.mxu0 0
    %370 = vmatpush1.bf16.msra.mxu0 %v353
    %371 = vmatprep.subr.bf16.mxu0 0
    %372 = vmatpush1.bf16.msra.mxu0 %v354
    %373 = vmatprep.subr.bf16.mxu0 0
    %374 = vmatpush1.bf16.msra.mxu0 %v355
    %375 = vmatprep.subr.bf16.mxu0 0
    %376 = vmatpush1.bf16.msra.mxu0 %v356
    %377 = vmatprep.subr.bf16.mxu0 0
    %378 = vmatpush1.bf16.msra.mxu0 %v357
    %379 = vmatprep.subr.bf16.mxu0 0
    %380 = vmatpush1.bf16.msra.mxu0 %v358
    %381 = vmatprep.subr.bf16.mxu0 0
    %382 = vmatpush1.bf16.msra.mxu0 %v359
    %383 = vmatprep.subr.bf16.mxu0 0
    %384 = vmatpush1.bf16.msra.mxu0 %v360
    %385 = vmatprep.subr.bf16.mxu0 0
    %386 = vmatpush1.bf16.msra.mxu0 0
    %387 = vmatprep.subr.bf16.mxu0 0
    %388 = vmatpush1.bf16.msra.mxu0 0
    %389 = vmatprep.subr.bf16.mxu0 0
    %390 = vmatpush1.bf16.msra.mxu0 0
    %391 = vmatprep.subr.bf16.mxu0 0
    %392 = vmatpush1.bf16.msra.mxu0 0
    %393 = vmatprep.subr.bf16.mxu0 0
    %394 = vmatpush1.bf16.msra.mxu0 0
    %395 = vmatprep.subr.bf16.mxu0 0
    %396 = vmatpush1.bf16.msra.mxu0 0
    %397 = vmatprep.subr.bf16.mxu0 0
    %398 = vmatpush1.bf16.msra.mxu0 0
    %399 = vmatprep.subr.bf16.mxu0 0
    %400 = vmatpush1.bf16.msra.mxu0 0
    %401 = vmatprep.mubr.bf16.mxu0 0
    %402 = vmatmul.mubr.bf16.gmra.mrb[0].mxu0 %v297
    %v403 = vpop.f32.mrb[0].mxu0
    %v404 = vadd.f32 %v319, %v403
    %v405 = vpop.f32.mrb[0].mxu0
    %v406 = vpop.f32.mrb[0].mxu0
    %v407 = vadd.f32 %v319, %v406
    %v408 = vpop.f32.mrb[0].mxu0
    %409 = vdwg.mxu0
    %410 = vst [vmem:[#allocation10] sm:$0xff] %v404
    %411 = vst [vmem:[#allocation10 + $0x8] sm:$0xff] %v407
    // Predicated region
    $region46: #{tpu_custom_call.1} parent=1 // pred_check
      _
    $region47: #{tpu_custom_call.1} parent=1 // pred_check_branch
      %413 = sbr.rel (0) target = $region49
    $region48: #{tpu_custom_call.1} parent=1 // pred_region
      %s415 = ssub.s32 256, 256
      %416 = vsyncadd [#allocation4], %s415
      %s417 = sshll.u32 [#allocation10], 4
      %s418 = int_to_ptr.vmem [resolvable:$true] %s417
      %423 = dma.vmem_to_hbm [thread:$0]  %s418, 256, %s7, [#allocation4], 128, 128, 8
    $region49: #{tpu_custom_call.1} parent=1 // pred_fallthru
      _
    // Predicated region
    $region50: #{tpu_custom_call.1} parent=1 // pred_check
      _
    $region51: #{tpu_custom_call.1} parent=1 // pred_check_branch
      %425 = sbr.rel (0) target = $region53
    $region52: #{tpu_custom_call.1} parent=1 // pred_region
      %426 = dma.done [#allocation4], 256
    $region53: #{tpu_custom_call.1} parent=1 // pred_fallthru
      _
    %427 = vsyncpa [#allocation3], 1
    %428 = vsyncpa [#allocation6], 1
    %429 = vsyncpa [#allocation9], 1
    %430 = vsyncpa [#allocation4], 1

</llo_original>
